<compile_context>
chip_gen: v7x
topology: tpu7x:2x2x1
jax: 0.10.0
libtpu: 0.0.40
codegen_flags: <defaults>
</compile_context>

<pallas_src>
import functools

import jax
import jax.numpy as jnp
from jax.experimental import pallas as pl
from jax.experimental.pallas import tpu as pltpu

_LANE = 128
_SUBLANE = 8


def _round_up(n, m):
    return (n + m - 1) // m * m


def alunet_kernel(x_ref, wp_ref, o_ref, *, hidden_p, in_features, out_features):
    """One batch tile; batch on the lane axis. Pure VPU/XLU math (no MXU).

    x_ref : (in_features, T)   activation tile (lane-dense)
    wp_ref: (hidden_p, 128)    packed weight slab (resident in VMEM)
    o_ref : (out_features, T)  output tile (lane-dense)

    Packed slab columns (all data in rows [0:hidden_p) -> aligned slices):
      [0, in_f)                        : W1 columns   (W1[j, k] at row j, col k)
      [in_f]                           : b1
      [in_f+1, in_f+1+out_f)           : W2^T columns (W2[o, j] at row j, col in_f+1+o)
      [in_f+1+out_f, in_f+1+2*out_f)   : b2 (row 0)
    """
    x = x_ref[...]                                                 # (in_f, T) f32

    # ---- fc1: relu(W1 @ x + b1) as 6 VPU broadcast-MACs (contraction dim is 6).
    acc = None
    for k in range(in_features):                                   # static -> unrolled
        xk = x[k:k + 1, :]                                         # (1, T)   sublane-bcast
        w1k = wp_ref[0:hidden_p, k:k + 1]                          # (Hp, 1)  lane-bcast
        term = xk * w1k                                            # (Hp, T)
        acc = term if acc is None else acc + term
    b1 = wp_ref[0:hidden_p, in_features:in_features + 1]           # (Hp, 1)
    h = jnp.maximum(acc + b1, 0.0)                                 # (Hp, T)

    # ---- fc2: per-sublane W2 scale + cross-sublane (XLU) reduce + b2.
    c_w2 = in_features + 1
    c_b2 = in_features + 1 + out_features
    outs = []
    for o in range(out_features):
        w2o = wp_ref[0:hidden_p, c_w2 + o:c_w2 + o + 1]            # (Hp, 1) = W2[o, :]^T
        b2o = wp_ref[0:1, c_b2 + o:c_b2 + o + 1]                   # (1, 1)
        yo = jnp.sum(h * w2o, axis=0, keepdims=True) + b2o         # (1, T)
        outs.append(yo)
    o_ref[...] = jnp.concatenate(outs, axis=0).astype(o_ref.dtype)


def pack_alunet_params(w1, b1, w2, b2):
    """Pack PyTorch-layout params into one (Hp, 128) lane-aligned f32 slab."""
    H, in_f = w1.shape
    out_f = w2.shape[0]
    hp = _round_up(max(H, 1), _SUBLANE)
    assert in_f + 1 + 2 * out_f <= _LANE
    pack = jnp.zeros((hp, _LANE), jnp.float32)
    pack = pack.at[:H, :in_f].set(jnp.asarray(w1, jnp.float32))
    pack = pack.at[:H, in_f].set(jnp.asarray(b1, jnp.float32))
    pack = pack.at[:H, in_f + 1:in_f + 1 + out_f].set(jnp.asarray(w2, jnp.float32).T)
    pack = pack.at[0, in_f + 1 + out_f:in_f + 1 + 2 * out_f].set(
        jnp.asarray(b2, jnp.float32))
    return pack, hp


def alunet_forward_fm(xt, w1, b1, w2, b2, *, block_b=8192):
    """Preferred (feature-major) entry point: xt is (6, B); returns (2, B).

    No transpose passes over the activations -- keep activations feature-major
    upstream/downstream (or fuse this tiny MLP into the surrounding kernel).
    """
    in_f, B = xt.shape
    H, in_f_w = w1.shape
    out_f = w2.shape[0]
    assert in_f == in_f_w and w2.shape[1] == H
    assert block_b % _LANE == 0 and block_b > 0

    pack, hp = pack_alunet_params(w1, b1, w2, b2)
    rows = pack.shape[0]

    # --- Tile selection:
    #   * tiles up to block_b lanes (default 8192) to amortize per-grid-step cost,
    #   * >= 2 tiles whenever B >= 256 so the "parallel" grid can use both v7x TCs,
    #   * batch padded only to the chosen tile (waste <= ~1 lane group per tile).
    bp = _round_up(B, _LANE)
    n_groups = bp // _LANE
    n_tiles = max(pl.cdiv(bp, block_b), 2 if n_groups >= 2 else 1)
    tile = _round_up(pl.cdiv(bp, n_tiles), _LANE)
    n_tiles = pl.cdiv(bp, tile)
    bp = n_tiles * tile

    xt = xt.astype(jnp.float32)
    if bp != B:
        xt = jnp.pad(xt, ((0, 0), (0, bp - B)))

    kernel = functools.partial(
        alunet_kernel, hidden_p=hp, in_features=in_f, out_features=out_f)

    # Honest HBM estimate: activation/output slabs are (8,128)-tile padded on the
    # sublane axis in HBM, so both streams move 8 rows regardless of 6/2 used.
    cost = pl.CostEstimate(
        flops=2 * bp * (in_f * hp + hp * out_f),
        transcendentals=0,
        bytes_accessed=2 * (_SUBLANE * bp * 4) + pack.size * 4,
    )

    # Double-buffered in/out blocks (sublane padded) + weight slab, with headroom.
    vmem_est = 2 * (_SUBLANE * tile * 4) * 2 + 2 * pack.size * 4
    vmem_limit = min(max(2 * vmem_est, 16 * 1024 * 1024), 48 * 1024 * 1024)

    yt = pl.pallas_call(
        kernel,
        out_shape=jax.ShapeDtypeStruct((out_f, bp), jnp.float32),
        grid=(n_tiles,),
        in_specs=[
            # Activation tile: block index walks the lane (batch) axis.
            pl.BlockSpec((in_f, tile), lambda i: (0, i)),
            # Packed weights: constant block index -> single DMA, resident in VMEM.
            pl.BlockSpec((rows, _LANE), lambda i: (0, 0)),
        ],
        out_specs=pl.BlockSpec((out_f, tile), lambda i: (0, i)),
        compiler_params=pltpu.CompilerParams(
            dimension_semantics=("parallel",),   # shard tiles across TCs (v7x)
            vmem_limit_bytes=vmem_limit,
        ),
        cost_estimate=cost,
    )(xt, pack)

    return yt[:, :B]


def alunet_forward(x, w1, b1, w2, b2, *, block_b=8192):
    """PyTorch-layout wrapper: x (B, 6) -> (B, 2), matching ALUNet.forward.

    The transposes here are standalone XLA passes over the activations; for peak
    throughput call alunet_forward_fm with feature-major activations instead.
    """
    yt = alunet_forward_fm(x.T, w1, b1, w2, b2, block_b=block_b)
    return yt.T


def init_alunet_params(key, hidden_size=8, in_features=6, out_features=2):
    """PyTorch nn.Linear-style init: U(-1/sqrt(fan_in), 1/sqrt(fan_in))."""
    k1, k2, k3, k4 = jax.random.split(key, 4)
    bound1 = 1.0 / jnp.sqrt(jnp.float32(in_features))
    bound2 = 1.0 / jnp.sqrt(jnp.float32(hidden_size))
    w1 = jax.random.uniform(k1, (hidden_size, in_features), jnp.float32, -bound1, bound1)
    b1 = jax.random.uniform(k2, (hidden_size,), jnp.float32, -bound1, bound1)
    w2 = jax.random.uniform(k3, (out_features, hidden_size), jnp.float32, -bound2, bound2)
    b2 = jax.random.uniform(k4, (out_features,), jnp.float32, -bound2, bound2)
    return w1, b1, w2, b2


def alunet_reference(x, w1, b1, w2, b2):
    h = jnp.maximum(x @ w1.T + b1, 0.0)
    return h @ w2.T + b2


if __name__ == "__main__":
    key = jax.random.PRNGKey(0)
    k_x, k_p = jax.random.split(key)

    hidden_size = 8
    w1, b1, w2, b2 = init_alunet_params(k_p, hidden_size=hidden_size)

    # Batches cover: tiny single-tile, non-multiple-of-128 (padding path), and a
    # multi-tile grid (exercises the >=2-tile / v7x-parallel path).
    for batch, block_b in ((8, 8192), (200, 8192), (1024, 256)):
        xb = jax.random.uniform(jax.random.fold_in(k_x, batch), (batch, 6), jnp.float32)
        ref = alunet_reference(xb, w1, b1, w2, b2)

        # PyTorch-layout path (module semantics).
        out = jax.block_until_ready(alunet_forward(xb, w1, b1, w2, b2, block_b=block_b))
        assert out.shape == (batch, 2)
        assert jnp.allclose(out, ref, atol=1e-4, rtol=1e-4), \
            float(jnp.max(jnp.abs(out - ref)))

        # Feature-major path (preferred, no wrapper transposes).
        out_fm = jax.block_until_ready(
            alunet_forward_fm(xb.T, w1, b1, w2, b2, block_b=block_b))
        assert out_fm.shape == (2, batch)
        assert jnp.allclose(out_fm.T, ref, atol=1e-4, rtol=1e-4), \
            float(jnp.max(jnp.abs(out_fm.T - ref)))

    print("KERNEL_OK")
</pallas_src>

<mosaic_0001>
module attributes {stable_mosaic.version = 11 : i64} {
  func.func @alunet_kernel(%arg0: i32, %arg1: memref<6x128xf32, #tpu.memory_space<vmem>>, %arg2: memref<8x128xf32, #tpu.memory_space<vmem>>, %arg3: memref<2x128xf32, #tpu.memory_space<vmem>>) attributes {dimension_semantics = [#tpu.dimension_semantics<parallel>], iteration_bounds = array<i64: 1>, scalar_prefetch = 0 : i64, scratch_operands = 0 : i64, tpu.core_type = #tpu.core_type<tc>, window_params = [{transform_indices = @transform_0, window_bounds = array<i64: 6, 128>}, {pipeline_mode = #tpu.pipeline_mode<synchronous>, transform_indices = @transform_1, window_bounds = array<i64: 8, 128>}, {transform_indices = @transform_2, window_bounds = array<i64: 2, 128>}]} {
    %c0 = arith.constant 0 : index
    %c0_0 = arith.constant 0 : index
    %0 = vector.load %arg1[%c0, %c0_0] : memref<6x128xf32, #tpu.memory_space<vmem>>, vector<6x128xf32>
    %1 = vector.extract_strided_slice %0 {offsets = [0, 0], sizes = [1, 128], strides = [1, 1]} : vector<6x128xf32> to vector<1x128xf32>
    %c0_1 = arith.constant 0 : index
    %c0_2 = arith.constant 0 : index
    %2 = vector.load %arg2[%c0_1, %c0_2] : memref<8x128xf32, #tpu.memory_space<vmem>>, vector<8x1xf32>
    %3 = vector.broadcast %1 : vector<1x128xf32> to vector<8x128xf32>
    %4 = vector.broadcast %2 : vector<8x1xf32> to vector<8x128xf32>
    %5 = arith.mulf %3, %4 : vector<8x128xf32>
    %6 = vector.extract_strided_slice %0 {offsets = [1, 0], sizes = [1, 128], strides = [1, 1]} : vector<6x128xf32> to vector<1x128xf32>
    %c0_3 = arith.constant 0 : index
    %c1 = arith.constant 1 : index
    %7 = vector.load %arg2[%c0_3, %c1] : memref<8x128xf32, #tpu.memory_space<vmem>>, vector<8x1xf32>
    %8 = vector.broadcast %6 : vector<1x128xf32> to vector<8x128xf32>
    %9 = vector.broadcast %7 : vector<8x1xf32> to vector<8x128xf32>
    %10 = arith.mulf %8, %9 : vector<8x128xf32>
    %11 = arith.addf %5, %10 : vector<8x128xf32>
    %12 = vector.extract_strided_slice %0 {offsets = [2, 0], sizes = [1, 128], strides = [1, 1]} : vector<6x128xf32> to vector<1x128xf32>
    %c0_4 = arith.constant 0 : index
    %c2 = arith.constant 2 : index
    %13 = vector.load %arg2[%c0_4, %c2] : memref<8x128xf32, #tpu.memory_space<vmem>>, vector<8x1xf32>
    %14 = vector.broadcast %12 : vector<1x128xf32> to vector<8x128xf32>
    %15 = vector.broadcast %13 : vector<8x1xf32> to vector<8x128xf32>
    %16 = arith.mulf %14, %15 : vector<8x128xf32>
    %17 = arith.addf %11, %16 : vector<8x128xf32>
    %18 = vector.extract_strided_slice %0 {offsets = [3, 0], sizes = [1, 128], strides = [1, 1]} : vector<6x128xf32> to vector<1x128xf32>
    %c0_5 = arith.constant 0 : index
    %c3 = arith.constant 3 : index
    %19 = vector.load %arg2[%c0_5, %c3] : memref<8x128xf32, #tpu.memory_space<vmem>>, vector<8x1xf32>
    %20 = vector.broadcast %18 : vector<1x128xf32> to vector<8x128xf32>
    %21 = vector.broadcast %19 : vector<8x1xf32> to vector<8x128xf32>
    %22 = arith.mulf %20, %21 : vector<8x128xf32>
    %23 = arith.addf %17, %22 : vector<8x128xf32>
    %24 = vector.extract_strided_slice %0 {offsets = [4, 0], sizes = [1, 128], strides = [1, 1]} : vector<6x128xf32> to vector<1x128xf32>
    %c0_6 = arith.constant 0 : index
    %c4 = arith.constant 4 : index
    %25 = vector.load %arg2[%c0_6, %c4] : memref<8x128xf32, #tpu.memory_space<vmem>>, vector<8x1xf32>
    %26 = vector.broadcast %24 : vector<1x128xf32> to vector<8x128xf32>
    %27 = vector.broadcast %25 : vector<8x1xf32> to vector<8x128xf32>
    %28 = arith.mulf %26, %27 : vector<8x128xf32>
    %29 = arith.addf %23, %28 : vector<8x128xf32>
    %30 = vector.extract_strided_slice %0 {offsets = [5, 0], sizes = [1, 128], strides = [1, 1]} : vector<6x128xf32> to vector<1x128xf32>
    %c0_7 = arith.constant 0 : index
    %c5 = arith.constant 5 : index
    %31 = vector.load %arg2[%c0_7, %c5] : memref<8x128xf32, #tpu.memory_space<vmem>>, vector<8x1xf32>
    %32 = vector.broadcast %30 : vector<1x128xf32> to vector<8x128xf32>
    %33 = vector.broadcast %31 : vector<8x1xf32> to vector<8x128xf32>
    %34 = arith.mulf %32, %33 : vector<8x128xf32>
    %35 = arith.addf %29, %34 : vector<8x128xf32>
    %c0_8 = arith.constant 0 : index
    %c6 = arith.constant 6 : index
    %36 = vector.load %arg2[%c0_8, %c6] : memref<8x128xf32, #tpu.memory_space<vmem>>, vector<8x1xf32>
    %37 = vector.broadcast %36 : vector<8x1xf32> to vector<8x128xf32>
    %38 = arith.addf %35, %37 : vector<8x128xf32>
    %cst = arith.constant 0.000000e+00 : f32
    %39 = vector.broadcast %cst : f32 to vector<8x128xf32>
    %40 = arith.maximumf %38, %39 : vector<8x128xf32>
    %c0_9 = arith.constant 0 : index
    %c7 = arith.constant 7 : index
    %41 = vector.load %arg2[%c0_9, %c7] : memref<8x128xf32, #tpu.memory_space<vmem>>, vector<8x1xf32>
    %c0_10 = arith.constant 0 : index
    %c9 = arith.constant 9 : index
    %42 = vector.load %arg2[%c0_10, %c9] : memref<8x128xf32, #tpu.memory_space<vmem>>, vector<1x1xf32>
    %43 = vector.broadcast %41 : vector<8x1xf32> to vector<8x128xf32>
    %44 = arith.mulf %40, %43 : vector<8x128xf32>
    %cst_11 = arith.constant dense<0.000000e+00> : vector<128xf32>
    %45 = vector.multi_reduction <add>, %44, %cst_11 [0] : vector<8x128xf32> to vector<128xf32>
    %46 = vector.shape_cast %45 : vector<128xf32> to vector<1x128xf32>
    %47 = vector.broadcast %42 : vector<1x1xf32> to vector<1x128xf32>
    %48 = arith.addf %46, %47 : vector<1x128xf32>
    %c0_12 = arith.constant 0 : index
    %c8 = arith.constant 8 : index
    %49 = vector.load %arg2[%c0_12, %c8] : memref<8x128xf32, #tpu.memory_space<vmem>>, vector<8x1xf32>
    %c0_13 = arith.constant 0 : index
    %c10 = arith.constant 10 : index
    %50 = vector.load %arg2[%c0_13, %c10] : memref<8x128xf32, #tpu.memory_space<vmem>>, vector<1x1xf32>
    %51 = vector.broadcast %49 : vector<8x1xf32> to vector<8x128xf32>
    %52 = arith.mulf %40, %51 : vector<8x128xf32>
    %cst_14 = arith.constant dense<0.000000e+00> : vector<128xf32>
    %53 = vector.multi_reduction <add>, %52, %cst_14 [0] : vector<8x128xf32> to vector<128xf32>
    %54 = vector.shape_cast %53 : vector<128xf32> to vector<1x128xf32>
    %55 = vector.broadcast %50 : vector<1x1xf32> to vector<1x128xf32>
    %56 = arith.addf %54, %55 : vector<1x128xf32>
    %57 = tpu.concatenate %48, %56 in 0 : vector<1x128xf32>, vector<1x128xf32> -> vector<2x128xf32>
    %c0_15 = arith.constant 0 : index
    %c0_16 = arith.constant 0 : index
    %58 = vector.load %arg3[%c0_15, %c0_16] : memref<2x128xf32, #tpu.memory_space<vmem>>, vector<2x128xf32>
    tpu.vector_store %arg3[%c0_15, %c0_16], %57 {strides = array<i32>} : memref<2x128xf32, #tpu.memory_space<vmem>>, vector<2x128xf32>,
    return
  }
  func.func @transform_0(%arg0: i32) -> (i32, i32) {
    %c0_i32 = arith.constant 0 : i32
    %c0_i32_0 = arith.constant 0 : i32
    return %c0_i32, %arg0 : i32, i32
  }
  func.func @transform_1(%arg0: i32) -> (i32, i32) {
    %c0_i32 = arith.constant 0 : i32
    %c0_i32_0 = arith.constant 0 : i32
    %c0_i32_1 = arith.constant 0 : i32
    return %c0_i32, %c0_i32_0 : i32, i32
  }
  func.func @transform_2(%arg0: i32) -> (i32, i32) {
    %c0_i32 = arith.constant 0 : i32
    %c0_i32_0 = arith.constant 0 : i32
    return %c0_i32, %arg0 : i32, i32
  }
}

</mosaic_0001>

<llo_original>
// kernel: tpu_custom_call.1
$region0: #{tpu_custom_call.1}
  #allocation0 [shape = 'u32[]', space=smem, size = 0x4, offset = 0x4, fixed_abs, tag = 'smem constant byte address 0x4 - core index']
  #allocation1 [shape = 'u32[144,128]{1,0:T(1,128)}', space=vmem, size = 0x12000, scoped, tag = 'internal scratch']
  %s0 = inlined_call_operand.hbm [shape: f32[6,128], index: 0, kind: input, shape index: {}]
  %s1 = inlined_call_operand.hbm [shape: f32[8,128], index: 1, kind: input, shape index: {}]
  %s2 = inlined_call_operand.hbm [shape: f32[2,128], index: 2, kind: output, shape index: {}]
  %s3 = sld [smem:[#allocation0]]
  $region26: #{tpu_custom_call.1} parent=0
    _
  %s5 = ssub.s32 1, %s3
  %s6 = scalar_select 0, %s5, %s3
  $region1: #{tpu_custom_call.1} parent=0
    #allocation2 [shape = 'u8[4096]{0}', space=vmem, size = 0x1000, scoped, tag = 'input window, operand 0, single buffered']
    #allocation3 [shape = 's32[1]{0}', space=sflag, size = 0x4, scoped, tag = 'scoped memory for tpu_custom_call.1']
    #allocation4 [shape = 's32[1]{0}', space=sflag, size = 0x4, scoped, tag = 'scoped memory for tpu_custom_call.1']
    #allocation5 [shape = 'u8[4096]{0}', space=vmem, size = 0x1000, scoped, tag = 'input window, operand 1, single buffered']
    #allocation6 [shape = 's32[1]{0}', space=sflag, size = 0x4, scoped, tag = 'scoped memory for tpu_custom_call.1']
    #allocation7 [shape = 'u8[1024]{0}', space=vmem, size = 0x400, scoped, tag = 'output window, operand 0, single buffered']
    %7 = vsyncpa [#allocation3], 0
    %8 = vsyncpa [#allocation6], 0
    %9 = vsyncpa [#allocation4], 0
    // Predicated region
    $region2: #{tpu_custom_call.1} parent=1 // pred_check
      _
    $region3: #{tpu_custom_call.1} parent=1 // pred_check_branch
      %11 = sbr.rel (0) target = $region5
    $region4: #{tpu_custom_call.1} parent=1 // pred_region
      %s13 = ssub.s32 128, 128
      %14 = vsyncadd [#allocation3], %s13
      %s16 = sshll.u32 [#allocation2], 4
      %s17 = int_to_ptr.vmem [resolvable:$true] %s16
      %19 = dma.hbm_to_vmem [thread:$0]  %s0, 128, %s17, [#allocation3]
    $region5: #{tpu_custom_call.1} parent=1 // pred_fallthru
      _
    // Predicated region
    $region6: #{tpu_custom_call.1} parent=1 // pred_check
      _
    $region7: #{tpu_custom_call.1} parent=1 // pred_check_branch
      %21 = sbr.rel (0) target = $region9
    $region8: #{tpu_custom_call.1} parent=1 // pred_region
      %s23 = ssub.s32 128, 128
      %24 = vsyncadd [#allocation6], %s23
      %s26 = sshll.u32 [#allocation5], 4
      %s27 = int_to_ptr.vmem [resolvable:$true] %s26
      %29 = dma.hbm_to_vmem [thread:$0]  %s1, 128, %s27, [#allocation6]
    $region9: #{tpu_custom_call.1} parent=1 // pred_fallthru
      _
    // Predicated region
    $region10: #{tpu_custom_call.1} parent=1 // pred_check
      _
    $region11: #{tpu_custom_call.1} parent=1 // pred_check_branch
      %31 = sbr.rel (0) target = $region13
    $region12: #{tpu_custom_call.1} parent=1 // pred_region
      %32 = dma.done [#allocation3], 128
    $region13: #{tpu_custom_call.1} parent=1 // pred_fallthru
      _
    // Predicated region
    $region14: #{tpu_custom_call.1} parent=1 // pred_check
      _
    $region15: #{tpu_custom_call.1} parent=1 // pred_check_branch
      %34 = sbr.rel (0) target = $region17
    $region16: #{tpu_custom_call.1} parent=1 // pred_region
      %35 = dma.done [#allocation6], 128
    $region17: #{tpu_custom_call.1} parent=1 // pred_fallthru
      _
    %v36 = vld [vmem:[#allocation2] sm:$0x3f]
    %v37 = vld [vmem:[#allocation5] sm:$0xff]
    %v38 = vlaneseq
    %v39 = vshrl.u32 %v38, 7
    %v40 = vsub.s32 0, %v39
    %v41 = vrot.slane %v36, %v40
    %43 = vset.pattern.permute.xlu0 0
    %44 = vperm.xlu0 %43, %v37
    %v45 = vpop.permute.xlu0 %44
    %v47 = vmul.f32 %v41, %v45
    %v48 = vlaneseq
    %v49 = vshrl.u32 %v48, 7
    %v50 = vsub.s32 1, %v49
    %v51 = vrot.slane %v36, %v50
    %52 = vset.pattern.permute.xlu0 1
    %53 = vperm.xlu0 %52, %v37
    %v54 = vpop.permute.xlu0 %53
    %v56 = vmul.f32 %v51, %v54
    %v57 = vadd.f32 %v47, %v56
    %v58 = vlaneseq
    %v59 = vshrl.u32 %v58, 7
    %v60 = vsub.s32 2, %v59
    %v61 = vrot.slane %v36, %v60
    %62 = vset.pattern.permute.xlu0 2
    %63 = vperm.xlu0 %62, %v37
    %v64 = vpop.permute.xlu0 %63
    %v66 = vmul.f32 %v61, %v64
    %v67 = vadd.f32 %v57, %v66
    %v68 = vlaneseq
    %v69 = vshrl.u32 %v68, 7
    %v70 = vsub.s32 3, %v69
    %v71 = vrot.slane %v36, %v70
    %72 = vset.pattern.permute.xlu0 3
    %73 = vperm.xlu0 %72, %v37
    %v74 = vpop.permute.xlu0 %73
    %v76 = vmul.f32 %v71, %v74
    %v77 = vadd.f32 %v67, %v76
    %v78 = vlaneseq
    %v79 = vshrl.u32 %v78, 7
    %v80 = vsub.s32 4, %v79
    %v81 = vrot.slane %v36, %v80
    %82 = vset.pattern.permute.xlu0 4
    %83 = vperm.xlu0 %82, %v37
    %v84 = vpop.permute.xlu0 %83
    %v86 = vmul.f32 %v81, %v84
    %v87 = vadd.f32 %v77, %v86
    %v88 = vlaneseq
    %v89 = vshrl.u32 %v88, 7
    %v90 = vsub.s32 5, %v89
    %v91 = vrot.slane %v36, %v90
    %92 = vset.pattern.permute.xlu0 5
    %93 = vperm.xlu0 %92, %v37
    %v94 = vpop.permute.xlu0 %93
    %v96 = vmul.f32 %v91, %v94
    %v97 = vadd.f32 %v87, %v96
    %98 = vset.pattern.permute.xlu0 6
    %99 = vperm.xlu0 %98, %v37
    %v100 = vpop.permute.xlu0 %99
    %v102 = vadd.f32 %v97, %v100
    %v103 = vmax.f32 %v102, 0.0
    %v104 = vld [vmem:[#allocation5] sm:$0x1]
    %105 = vset.pattern.permute.xlu0 7
    %106 = vperm.xlu0 %105, %v37
    %v107 = vpop.permute.xlu0 %106
    %v109 = vmul.f32 %v103, %v107
    %v110 = vrot.slane %v109, 4
    %v111 = vadd.f32 %v109, %v110
    %v112 = vrot.slane %v111, 2
    %v113 = vadd.f32 %v111, %v112
    %v114 = vrot.slane %v113, 1
    %v115 = vadd.f32 %v113, %v114
    %117 = vset.pattern.permute.xlu0 9
    %118 = vperm.xlu0 %117, %v104
    %v119 = vpop.permute.xlu0 %118
    %v121 = vadd.f32 %v115, %v119
    %122 = vset.pattern.permute.xlu0 8
    %123 = vperm.xlu0 %122, %v37
    %v124 = vpop.permute.xlu0 %123
    %v126 = vmul.f32 %v103, %v124
    %v127 = vrot.slane %v126, 4
    %v128 = vadd.f32 %v126, %v127
    %v129 = vrot.slane %v128, 2
    %v130 = vadd.f32 %v128, %v129
    %v131 = vrot.slane %v130, 1
    %v132 = vadd.f32 %v130, %v131
    %133 = vset.pattern.permute.xlu0 10
    %134 = vperm.xlu0 %133, %v104
    %v135 = vpop.permute.xlu0 %134
    %v137 = vadd.f32 %v132, %v135
    %v139 = vrot.slane %v137, 7
    %vm141 = vcmask 1040384
    %v142 = vsel %vm141, %v121, %v139
    %143 = vst [vmem:[#allocation7] sm:$0x3] %v142
    // Predicated region
    $region18: #{tpu_custom_call.1} parent=1 // pred_check
      _
    $region19: #{tpu_custom_call.1} parent=1 // pred_check_branch
      %145 = sbr.rel (0) target = $region21
    $region20: #{tpu_custom_call.1} parent=1 // pred_region
      %s147 = ssub.s32 32, 32
      %148 = vsyncadd [#allocation4], %s147
      %s150 = sshll.u32 [#allocation7], 4
      %s151 = int_to_ptr.vmem [resolvable:$true] %s150
      %153 = dma.vmem_to_hbm [thread:$0]  %s151, 32, %s2, [#allocation4]
    $region21: #{tpu_custom_call.1} parent=1 // pred_fallthru
      _
    // Predicated region
    $region22: #{tpu_custom_call.1} parent=1 // pred_check
      _
    $region23: #{tpu_custom_call.1} parent=1 // pred_check_branch
      %155 = sbr.rel (0) target = $region25
    $region24: #{tpu_custom_call.1} parent=1 // pred_region
      %156 = dma.done [#allocation4], 32
    $region25: #{tpu_custom_call.1} parent=1 // pred_fallthru
      _
    %157 = vsyncpa [#allocation3], 1
    %158 = vsyncpa [#allocation6], 1
    %159 = vsyncpa [#allocation4], 1

</llo_original>
